<compile_context>
chip_gen: v7x
topology: tpu7x:2x2x1
jax: 0.10.0
libtpu: 0.0.40
codegen_flags: <defaults>
</compile_context>

<pallas_src>
import functools

import jax
import jax.numpy as jnp
from jax.experimental import pallas as pl
from jax.experimental.pallas import tpu as pltpu


def _round_up(x, m):
    return ((x + m - 1) // m) * m


def _tpu_generation():
    """Best-effort TPU generation sniff: 7 for v7x, 6 for v6e, 5 for v5e, else 0."""
    try:
        kind = jax.devices()[0].device_kind.lower()
    except Exception:
        return 0
    for g in (7, 6, 5, 4):
        if ("v%d" % g) in kind:
            return g
    return 0


# ---------------------------------------------------------------------------
# Shared per-tile compute: projection head + prototype classification.
# Block layout: x [C, T] (channels on sublanes, voxels on lanes).
# ---------------------------------------------------------------------------
def _proto_head_compute(x_ref, w1_ref, w2_ref, pvc_ref, protos_ref, pvk_ref,
                        *, num_classes, num_prototype):
    K = num_classes
    x = x_ref[...].astype(jnp.float32)                       # [C, T]
    C = x.shape[0]

    w1 = w1_ref[...]                                          # [C, C]  (BN folded in)
    w2 = w2_ref[...]                                          # [C, C]
    b1 = pvc_ref[:, 0:1]                                      # [C, 1]  (BN folded in)
    b2 = pvc_ref[:, 1:2]
    lnf_w = pvc_ref[:, 2:3]
    lnf_b = pvc_ref[:, 3:4]
    lnm_w = pvk_ref[:, 0:1]                                   # [K, 1]
    lnm_b = pvk_ref[:, 1:2]

    # --- ProjectionHead: Conv3d(k=1) -> BN(eval, folded) -> ReLU -> Conv3d(k=1)
    h = jnp.dot(w1, x, preferred_element_type=jnp.float32) + b1     # [C, T]
    h = jnp.maximum(h, 0.0)
    c = jnp.dot(w2, h, preferred_element_type=jnp.float32) + b2     # [C, T]

    # F.normalize(p=2, dim=channel) per voxel; PyTorch eps=1e-12 on the norm,
    # expressed as a clamp on the squared norm + rsqrt.
    ssq = jnp.sum(c * c, axis=0, keepdims=True)                     # [1, T]
    inv_c = jax.lax.rsqrt(jnp.maximum(ssq, 1e-24))
    c = c * inv_c

    # --- feat_norm: LayerNorm over channels (eps=1e-5) -----------------------
    # After the L2 normalize, sum(c^2) == ssq * inv_c^2 (== 1 except in the
    # fully-degenerate clamped case), so var = mean(c^2) - mu^2 without a
    # second [C,T] elementwise-square pass + channel reduction.
    s1 = ssq * (inv_c * inv_c)                                      # [1, T]
    mu = jnp.mean(c, axis=0, keepdims=True)
    var = s1 * (1.0 / C) - mu * mu
    z = (c - mu) * jax.lax.rsqrt(var + 1e-5) * lnf_w + lnf_b

    # Second l2_normalize: fold the per-voxel scale into the [K, T] result of
    # the prototype matmul (inv_z > 0, so the max over prototypes commutes).
    inv_z = jax.lax.rsqrt(
        jnp.maximum(jnp.sum(z * z, axis=0, keepdims=True), 1e-24))

    # --- masks = einsum('nd,kmd->nmk'); amax over prototypes m ---------------
    # protos_ref is the stacked [M*K, C] (already L2-normalized, row m*K+k is
    # prototype m of class k): one MXU matmul, then a max over the M row groups.
    res = jnp.dot(protos_ref[...], z, preferred_element_type=jnp.float32)   # [M*K, T]
    seg = res[0:K]
    for m in range(1, num_prototype):
        seg = jnp.maximum(seg, res[m * K:(m + 1) * K])
    seg = seg * inv_z                                               # [K, T]

    # --- mask_norm: LayerNorm over the class axis (eps=1e-5) -----------------
    mu2 = jnp.mean(seg, axis=0, keepdims=True)
    var2 = jnp.mean((seg - mu2) ** 2, axis=0, keepdims=True)
    seg = (seg - mu2) * jax.lax.rsqrt(var2 + 1e-5) * lnm_w + lnm_b
    return c, seg


def _proto_head_kernel(x_ref, w1_ref, w2_ref, pvc_ref, protos_ref, pvk_ref,
                       c_ref, seg_ref, *, num_classes, num_prototype):
    c, seg = _proto_head_compute(x_ref, w1_ref, w2_ref, pvc_ref, protos_ref,
                                 pvk_ref, num_classes=num_classes,
                                 num_prototype=num_prototype)
    c_ref[...] = c.astype(c_ref.dtype)
    seg_ref[...] = seg.astype(seg_ref.dtype)


def _proto_head_kernel_seg_only(x_ref, w1_ref, w2_ref, pvc_ref, protos_ref,
                                pvk_ref, seg_ref, *, num_classes, num_prototype):
    _, seg = _proto_head_compute(x_ref, w1_ref, w2_ref, pvc_ref, protos_ref,
                                 pvk_ref, num_classes=num_classes,
                                 num_prototype=num_prototype)
    seg_ref[...] = seg.astype(seg_ref.dtype)


# ---------------------------------------------------------------------------
# Wrapper: test_lproto branch of VNetProto.forward, given the decoder feature
# map feat[-1] in NCDHW layout.
#   return_c=True  -> (out_seg [b,K,d,h,w], c [b,C,d,h,w])   (module semantics)
#   return_c=False -> out_seg only (skips the c HBM writeback)
# ---------------------------------------------------------------------------
def vnet_proto_forward(feats, kp, *, num_classes, num_prototype,
                       tile_n=None, return_c=True, out_dtype=jnp.float32):
    b, C, d, h, w = feats.shape
    K = num_classes
    S = d * h * w

    gen = _tpu_generation()
    if tile_n is None:
        # v7x: 64 MiB VMEM / 2 TCs -> smaller tiles; v5e/v6e: 128 MiB VMEM,
        # HBM-bound -> amortize grid/DMA overhead with 32K-voxel tiles.
        tile_n = 16384 if gen >= 7 else 32768
    assert tile_n % 128 == 0

    # Free reshape (no transpose): NCDHW -> [b, C, S]
    x = feats.reshape(b, C, S)

    # Voxel tile: as large as requested, never larger than the (lane-aligned)
    # voxel count; pad the voxel axis so the tile divides it evenly.
    tile = min(tile_n, _round_up(S, 128))
    if gen >= 7 and b == 1 and S > 128:
        # Two TensorCores per v7x chip: make sure the grid has >= 2 blocks.
        tile = min(tile, max(128, _round_up((S + 1) // 2, 128)))
    s_pad = _round_up(S, tile)
    if s_pad != S:
        x = jnp.pad(x, ((0, 0), (0, 0), (0, s_pad - S)))

    grid = (b, s_pad // tile)

    # Explicit VMEM budget so the larger tiles keep double-buffering
    # (default scoped limit is 16 MiB on v5e / 32 MiB on v6e, v7x).
    cap = (48 << 20) if gen >= 7 else (64 << 20)
    isz_x = jnp.dtype(x.dtype).itemsize
    isz_o = jnp.dtype(out_dtype).itemsize
    io_per_step = C * tile * isz_x + K * tile * isz_o
    if return_c:
        io_per_step += C * tile * isz_o
    need = 2 * io_per_step + 8 * C * tile * 4 + (2 << 20)   # dbuf I/O + f32 intermediates
    vmem_limit = int(min(cap, max(need, 16 << 20)))

    full = lambda bi, si: (0, 0)
    rows = lambda bi, si: (bi, 0, si)

    in_specs = [
        pl.BlockSpec((None, C, tile), rows),                 # x (batch dim squeezed)
        pl.BlockSpec((C, C), full),                          # W1 (BN folded)
        pl.BlockSpec((C, C), full),                          # W2
        pl.BlockSpec((C, 4), full),                          # [b1', b2, lnf_w, lnf_b]
        pl.BlockSpec((num_prototype * K, C), full),          # stacked prototypes (L2-normed)
        pl.BlockSpec((K, 2), full),                          # [lnm_w, lnm_b]
    ]
    compiler_params = pltpu.CompilerParams(
        dimension_semantics=("parallel", "parallel"),
        vmem_limit_bytes=vmem_limit)
    args = (x, kp["w1"], kp["w2"], kp["pvc"], kp["protos"], kp["pvk"])

    if return_c:
        kernel = functools.partial(_proto_head_kernel,
                                   num_classes=K, num_prototype=num_prototype)
        c_pad, seg_pad = pl.pallas_call(
            kernel,
            out_shape=(jax.ShapeDtypeStruct((b, C, s_pad), out_dtype),
                       jax.ShapeDtypeStruct((b, K, s_pad), out_dtype)),
            grid_spec=pltpu.PrefetchScalarGridSpec(
                num_scalar_prefetch=0, grid=grid,
                in_specs=in_specs,
                out_specs=[pl.BlockSpec((None, C, tile), rows),
                           pl.BlockSpec((None, K, tile), rows)]),
            compiler_params=compiler_params,
        )(*args)
        # Free reshapes back (no transpose): drop voxel padding, restore d,h,w.
        c_out = c_pad[:, :, :S].reshape(b, C, d, h, w)
        out_seg = seg_pad[:, :, :S].reshape(b, K, d, h, w)
        return out_seg, c_out

    kernel = functools.partial(_proto_head_kernel_seg_only,
                               num_classes=K, num_prototype=num_prototype)
    seg_pad = pl.pallas_call(
        kernel,
        out_shape=jax.ShapeDtypeStruct((b, K, s_pad), out_dtype),
        grid_spec=pltpu.PrefetchScalarGridSpec(
            num_scalar_prefetch=0, grid=grid,
            in_specs=in_specs,
            out_specs=pl.BlockSpec((None, K, tile), rows)),
        compiler_params=compiler_params,
    )(*args)
    return seg_pad[:, :, :S].reshape(b, K, d, h, w)


# ---------------------------------------------------------------------------
# Parameter preparation: fold eval-mode BatchNorm into W1/b1, L2-normalize the
# prototypes and stack them to [M*K, C], consolidate the small vectors.
# ---------------------------------------------------------------------------
def prepare_kernel_params(raw, num_classes, num_prototype):
    bn_scale = raw["gamma"] / jnp.sqrt(raw["rv"] + 1e-5)
    bn_shift = raw["beta"] - raw["rm"] * bn_scale
    w1f = raw["w1"] * bn_scale[:, None]
    b1f = raw["b1"] * bn_scale + bn_shift
    pvc = jnp.stack([b1f, raw["b2"], raw["lnf_w"], raw["lnf_b"]], axis=1)  # (C, 4)
    pvk = jnp.stack([raw["lnm_w"], raw["lnm_b"]], axis=1)                  # (K, 2)
    protos = raw["protos"]                                                 # (K, M, C)
    protos = protos / jnp.maximum(
        jnp.linalg.norm(protos, axis=-1, keepdims=True), 1e-12)
    C = protos.shape[-1]
    protos_stacked = jnp.transpose(protos, (1, 0, 2)).reshape(
        num_prototype * num_classes, C)                                    # (M*K, C)
    return {"w1": w1f, "w2": raw["w2"], "pvc": pvc,
            "protos": protos_stacked, "pvk": pvk}


# ---------------------------------------------------------------------------
# Pure-JAX reference mirroring the PyTorch math (unfolded BN, voxel-major)
# ---------------------------------------------------------------------------
def reference(feats, raw, num_classes, num_prototype):
    b, C, d, hh, ww = feats.shape
    x = jnp.transpose(feats, (0, 2, 3, 4, 1)).reshape(-1, C)
    h1 = x @ raw["w1"].T + raw["b1"]
    h1 = (h1 - raw["rm"]) / jnp.sqrt(raw["rv"] + 1e-5) * raw["gamma"] + raw["beta"]
    h1 = jnp.maximum(h1, 0.0)
    c = h1 @ raw["w2"].T + raw["b2"]
    c = c / jnp.maximum(jnp.linalg.norm(c, axis=-1, keepdims=True), 1e-12)
    mu = jnp.mean(c, -1, keepdims=True)
    var = jnp.mean((c - mu) ** 2, -1, keepdims=True)
    z = (c - mu) / jnp.sqrt(var + 1e-5) * raw["lnf_w"] + raw["lnf_b"]
    z = z / jnp.maximum(jnp.linalg.norm(z, axis=-1, keepdims=True), 1e-12)
    protos = raw["protos"]
    protos = protos / jnp.maximum(
        jnp.linalg.norm(protos, axis=-1, keepdims=True), 1e-12)
    masks = jnp.einsum('nd,kmd->nmk', z, protos)
    seg = jnp.max(masks, axis=1)
    mu2 = jnp.mean(seg, -1, keepdims=True)
    var2 = jnp.mean((seg - mu2) ** 2, -1, keepdims=True)
    seg = (seg - mu2) / jnp.sqrt(var2 + 1e-5) * raw["lnm_w"] + raw["lnm_b"]
    out_seg = jnp.transpose(seg.reshape(b, d, hh, ww, num_classes), (0, 4, 1, 2, 3))
    c5 = jnp.transpose(c.reshape(b, d, hh, ww, C), (0, 4, 1, 2, 3))
    return out_seg, c5


# ---------------------------------------------------------------------------
# Deterministic raw-parameter init (shapes from VNetProto.__init__)
# ---------------------------------------------------------------------------
def init_raw_params(key, C, K, M):
    ks = jax.random.split(key, 12)
    return {
        # ProjectionHead(convmlp): Conv3d(C,C,1) -> BN3d(C) -> ReLU -> Conv3d(C,C,1)
        "w1": jax.random.normal(ks[0], (C, C), jnp.float32) / jnp.sqrt(C),
        "b1": 0.01 * jax.random.normal(ks[1], (C,), jnp.float32),
        "gamma": 1.0 + 0.1 * jax.random.normal(ks[2], (C,), jnp.float32),
        "beta": 0.1 * jax.random.normal(ks[3], (C,), jnp.float32),
        "rm": 0.05 * jax.random.normal(ks[4], (C,), jnp.float32),
        "rv": 1.0 + 0.1 * jax.random.uniform(ks[5], (C,), jnp.float32),
        "w2": jax.random.normal(ks[6], (C, C), jnp.float32) / jnp.sqrt(C),
        "b2": 0.01 * jax.random.normal(ks[7], (C,), jnp.float32),
        # feat_norm = LayerNorm(C); mask_norm = LayerNorm(K)
        "lnf_w": 1.0 + 0.1 * jax.random.normal(ks[8], (C,), jnp.float32),
        "lnf_b": 0.1 * jax.random.normal(ks[9], (C,), jnp.float32),
        "lnm_w": 1.0 + 0.1 * jax.random.normal(ks[10], (K,), jnp.float32),
        "lnm_b": 0.1 * jax.random.normal(ks[11], (K,), jnp.float32),
        # prototypes_labeled: (K, M, C), trunc_normal(std=0.02) ~ normal here
        "protos": 0.02 * jax.random.normal(jax.random.fold_in(key, 99),
                                           (K, M, C), jnp.float32),
    }


def _assert_close(name, a, b, *, atol, rtol):
    a = jnp.asarray(a, jnp.float32)
    b = jnp.asarray(b, jnp.float32)
    if not bool(jnp.allclose(a, b, rtol=rtol, atol=atol)):
        raise AssertionError(
            f"{name} mismatch: max |diff| = {float(jnp.max(jnp.abs(a - b)))}")


if __name__ == "__main__":
    # Small shapes: n_classes=3 -> K = n_classes + 1 = 4 prototype classes,
    # decoder feature channels C=32 (vnet.feat_channels[-1]),
    # feature-map spatial grid (d, h, w) = (4, 8, 8), batch b = 2.
    key = jax.random.PRNGKey(0)
    b, C, d, h, w = 2, 32, 4, 8, 8
    n_classes = 3
    K = n_classes + 1

    feats = jax.random.normal(jax.random.fold_in(key, 1),
                              (b, C, d, h, w), jnp.float32)

    for M in (1, 2):  # validate both the single- and multi-prototype paths
        raw = init_raw_params(jax.random.fold_in(key, 10 + M), C, K, M)
        kparams = prepare_kernel_params(raw, K, M)

        out_seg, c_out = vnet_proto_forward(
            feats, kparams, num_classes=K, num_prototype=M)
        jax.block_until_ready((out_seg, c_out))

        seg_ref, c_ref = reference(feats, raw, K, M)
        assert out_seg.shape == (b, K, d, h, w)
        assert c_out.shape == (b, C, d, h, w)
        _assert_close(f"c (M={M})", c_out, c_ref, atol=1e-4, rtol=1e-3)
        _assert_close(f"seg (M={M})", out_seg, seg_ref, atol=1e-3, rtol=1e-3)

    # Seg-only path: skips the c writeback (~47% of the f32 HBM traffic).
    raw = init_raw_params(jax.random.fold_in(key, 11), C, K, 1)
    kparams = prepare_kernel_params(raw, K, 1)
    seg_only = vnet_proto_forward(feats, kparams, num_classes=K,
                                  num_prototype=1, return_c=False)
    jax.block_until_ready(seg_only)
    seg_ref, _ = reference(feats, raw, K, 1)
    assert seg_only.shape == (b, K, d, h, w)
    _assert_close("seg_only", seg_only, seg_ref, atol=1e-3, rtol=1e-3)

    # bf16 HBM-I/O config (the memory-bound v5e/v6e recommendation):
    # f32 math inside the kernel, bf16 input + bf16 outputs. Smoke-checked for
    # shape / finiteness only (bf16 quantization exceeds the f32 tolerances).
    out_seg_bf, c_bf = vnet_proto_forward(
        feats.astype(jnp.bfloat16), kparams, num_classes=K, num_prototype=1,
        out_dtype=jnp.bfloat16)
    jax.block_until_ready((out_seg_bf, c_bf))
    assert out_seg_bf.shape == (b, K, d, h, w) and out_seg_bf.dtype == jnp.bfloat16
    assert c_bf.shape == (b, C, d, h, w) and c_bf.dtype == jnp.bfloat16
    assert bool(jnp.all(jnp.isfinite(out_seg_bf.astype(jnp.float32))))
    assert bool(jnp.all(jnp.isfinite(c_bf.astype(jnp.float32))))

    print("KERNEL_OK")
</pallas_src>

<mosaic_0001>
module attributes {stable_mosaic.version = 11 : i64} {
  func.func @_proto_head_kernel(%arg0: i32, %arg1: i32, %arg2: memref<1x32x256xf32, #tpu.memory_space<vmem>>, %arg3: memref<32x32xf32, #tpu.memory_space<vmem>>, %arg4: memref<32x32xf32, #tpu.memory_space<vmem>>, %arg5: memref<32x4xf32, #tpu.memory_space<vmem>>, %arg6: memref<4x32xf32, #tpu.memory_space<vmem>>, %arg7: memref<4x2xf32, #tpu.memory_space<vmem>>, %arg8: memref<1x32x256xf32, #tpu.memory_space<vmem>>, %arg9: memref<1x4x256xf32, #tpu.memory_space<vmem>>) attributes {dimension_semantics = [#tpu.dimension_semantics<parallel>, #tpu.dimension_semantics<parallel>], iteration_bounds = array<i64: 2, 1>, scalar_prefetch = 0 : i64, scratch_operands = 0 : i64, tpu.core_type = #tpu.core_type<tc>, window_params = [{transform_indices = @transform_0, window_bounds = array<i64: 1, 32, 256>}, {pipeline_mode = #tpu.pipeline_mode<synchronous>, transform_indices = @transform_1, window_bounds = array<i64: 32, 32>}, {pipeline_mode = #tpu.pipeline_mode<synchronous>, transform_indices = @transform_2, window_bounds = array<i64: 32, 32>}, {pipeline_mode = #tpu.pipeline_mode<synchronous>, transform_indices = @transform_3, window_bounds = array<i64: 32, 4>}, {pipeline_mode = #tpu.pipeline_mode<synchronous>, transform_indices = @transform_4, window_bounds = array<i64: 4, 32>}, {pipeline_mode = #tpu.pipeline_mode<synchronous>, transform_indices = @transform_5, window_bounds = array<i64: 4, 2>}, {transform_indices = @transform_6, window_bounds = array<i64: 1, 32, 256>}, {transform_indices = @transform_7, window_bounds = array<i64: 1, 4, 256>}]} {
    %c0 = arith.constant 0 : index
    %c0_0 = arith.constant 0 : index
    %c0_1 = arith.constant 0 : index
    %0 = vector.load %arg2[%c0, %c0_0, %c0_1] : memref<1x32x256xf32, #tpu.memory_space<vmem>>, vector<1x32x256xf32>
    %1 = vector.shape_cast %0 : vector<1x32x256xf32> to vector<32x256xf32>
    %c0_2 = arith.constant 0 : index
    %c0_3 = arith.constant 0 : index
    %2 = vector.load %arg3[%c0_2, %c0_3] : memref<32x32xf32, #tpu.memory_space<vmem>>, vector<32x32xf32>
    %c0_4 = arith.constant 0 : index
    %c0_5 = arith.constant 0 : index
    %3 = vector.load %arg4[%c0_4, %c0_5] : memref<32x32xf32, #tpu.memory_space<vmem>>, vector<32x32xf32>
    %c0_6 = arith.constant 0 : index
    %c0_7 = arith.constant 0 : index
    %4 = vector.load %arg5[%c0_6, %c0_7] : memref<32x4xf32, #tpu.memory_space<vmem>>, vector<32x1xf32>
    %c0_8 = arith.constant 0 : index
    %c1 = arith.constant 1 : index
    %5 = vector.load %arg5[%c0_8, %c1] : memref<32x4xf32, #tpu.memory_space<vmem>>, vector<32x1xf32>
    %c0_9 = arith.constant 0 : index
    %c2 = arith.constant 2 : index
    %6 = vector.load %arg5[%c0_9, %c2] : memref<32x4xf32, #tpu.memory_space<vmem>>, vector<32x1xf32>
    %c0_10 = arith.constant 0 : index
    %c3 = arith.constant 3 : index
    %7 = vector.load %arg5[%c0_10, %c3] : memref<32x4xf32, #tpu.memory_space<vmem>>, vector<32x1xf32>
    %c0_11 = arith.constant 0 : index
    %c0_12 = arith.constant 0 : index
    %8 = vector.load %arg7[%c0_11, %c0_12] : memref<4x2xf32, #tpu.memory_space<vmem>>, vector<4x1xf32>
    %c0_13 = arith.constant 0 : index
    %c1_14 = arith.constant 1 : index
    %9 = vector.load %arg7[%c0_13, %c1_14] : memref<4x2xf32, #tpu.memory_space<vmem>>, vector<4x1xf32>
    %cst = arith.constant dense<0.000000e+00> : vector<32x256xf32>
    %10 = tpu.matmul %2, %1, %cst {dimension_numbers = #tpu.dot_dimension_numbers<[1], [0], [0], [1], [0, 0, 1, 1], [], []>} : vector<32x32xf32>, vector<32x256xf32>, vector<32x256xf32> -> vector<32x256xf32>
    %11 = vector.broadcast %4 : vector<32x1xf32> to vector<32x256xf32>
    %12 = arith.addf %10, %11 : vector<32x256xf32>
    %cst_15 = arith.constant 0.000000e+00 : f32
    %13 = vector.broadcast %cst_15 : f32 to vector<32x256xf32>
    %14 = arith.maximumf %12, %13 : vector<32x256xf32>
    %cst_16 = arith.constant dense<0.000000e+00> : vector<32x256xf32>
    %15 = tpu.matmul %3, %14, %cst_16 {dimension_numbers = #tpu.dot_dimension_numbers<[1], [0], [0], [1], [0, 0, 1, 1], [], []>} : vector<32x32xf32>, vector<32x256xf32>, vector<32x256xf32> -> vector<32x256xf32>
    %16 = vector.broadcast %5 : vector<32x1xf32> to vector<32x256xf32>
    %17 = arith.addf %15, %16 : vector<32x256xf32>
    %18 = arith.mulf %17, %17 : vector<32x256xf32>
    %cst_17 = arith.constant dense<0.000000e+00> : vector<256xf32>
    %19 = vector.multi_reduction <add>, %18, %cst_17 [0] : vector<32x256xf32> to vector<256xf32>
    %20 = vector.shape_cast %19 : vector<256xf32> to vector<1x256xf32>
    %cst_18 = arith.constant 1.000000e-24 : f32
    %21 = vector.broadcast %cst_18 : f32 to vector<1x256xf32>
    %22 = arith.maximumf %20, %21 : vector<1x256xf32>
    %23 = math.rsqrt %22 : vector<1x256xf32>
    %24 = vector.broadcast %23 : vector<1x256xf32> to vector<32x256xf32>
    %25 = arith.mulf %17, %24 : vector<32x256xf32>
    %26 = arith.mulf %23, %23 : vector<1x256xf32>
    %27 = arith.mulf %20, %26 : vector<1x256xf32>
    %cst_19 = arith.constant dense<0.000000e+00> : vector<256xf32>
    %28 = vector.multi_reduction <add>, %25, %cst_19 [0] : vector<32x256xf32> to vector<256xf32>
    %29 = vector.shape_cast %28 : vector<256xf32> to vector<1x256xf32>
    %cst_20 = arith.constant 3.200000e+01 : f32
    %30 = vector.broadcast %cst_20 : f32 to vector<1x256xf32>
    %31 = arith.divf %29, %30 : vector<1x256xf32>
    %cst_21 = arith.constant 3.125000e-02 : f32
    %32 = vector.broadcast %cst_21 : f32 to vector<1x256xf32>
    %33 = arith.mulf %27, %32 : vector<1x256xf32>
    %34 = arith.mulf %31, %31 : vector<1x256xf32>
    %35 = arith.subf %33, %34 : vector<1x256xf32>
    %36 = vector.broadcast %31 : vector<1x256xf32> to vector<32x256xf32>
    %37 = arith.subf %25, %36 : vector<32x256xf32>
    %cst_22 = arith.constant 9.99999974E-6 : f32
    %38 = vector.broadcast %cst_22 : f32 to vector<1x256xf32>
    %39 = arith.addf %35, %38 : vector<1x256xf32>
    %40 = math.rsqrt %39 : vector<1x256xf32>
    %41 = vector.broadcast %40 : vector<1x256xf32> to vector<32x256xf32>
    %42 = arith.mulf %37, %41 : vector<32x256xf32>
    %43 = vector.broadcast %6 : vector<32x1xf32> to vector<32x256xf32>
    %44 = arith.mulf %42, %43 : vector<32x256xf32>
    %45 = vector.broadcast %7 : vector<32x1xf32> to vector<32x256xf32>
    %46 = arith.addf %44, %45 : vector<32x256xf32>
    %47 = arith.mulf %46, %46 : vector<32x256xf32>
    %cst_23 = arith.constant dense<0.000000e+00> : vector<256xf32>
    %48 = vector.multi_reduction <add>, %47, %cst_23 [0] : vector<32x256xf32> to vector<256xf32>
    %49 = vector.shape_cast %48 : vector<256xf32> to vector<1x256xf32>
    %cst_24 = arith.constant 1.000000e-24 : f32
    %50 = vector.broadcast %cst_24 : f32 to vector<1x256xf32>
    %51 = arith.maximumf %49, %50 : vector<1x256xf32>
    %52 = math.rsqrt %51 : vector<1x256xf32>
    %c0_25 = arith.constant 0 : index
    %c0_26 = arith.constant 0 : index
    %53 = vector.load %arg6[%c0_25, %c0_26] : memref<4x32xf32, #tpu.memory_space<vmem>>, vector<4x32xf32>
    %cst_27 = arith.constant dense<0.000000e+00> : vector<4x256xf32>
    %54 = tpu.matmul %53, %46, %cst_27 {dimension_numbers = #tpu.dot_dimension_numbers<[1], [0], [0], [1], [0, 0, 1, 1], [], []>} : vector<4x32xf32>, vector<32x256xf32>, vector<4x256xf32> -> vector<4x256xf32>
    %55 = vector.broadcast %52 : vector<1x256xf32> to vector<4x256xf32>
    %56 = arith.mulf %54, %55 : vector<4x256xf32>
    %cst_28 = arith.constant dense<0.000000e+00> : vector<256xf32>
    %57 = vector.multi_reduction <add>, %56, %cst_28 [0] : vector<4x256xf32> to vector<256xf32>
    %58 = vector.shape_cast %57 : vector<256xf32> to vector<1x256xf32>
    %cst_29 = arith.constant 4.000000e+00 : f32
    %59 = vector.broadcast %cst_29 : f32 to vector<1x256xf32>
    %60 = arith.divf %58, %59 : vector<1x256xf32>
    %61 = vector.broadcast %60 : vector<1x256xf32> to vector<4x256xf32>
    %62 = arith.subf %56, %61 : vector<4x256xf32>
    %63 = arith.mulf %62, %62 : vector<4x256xf32>
    %cst_30 = arith.constant dense<0.000000e+00> : vector<256xf32>
    %64 = vector.multi_reduction <add>, %63, %cst_30 [0] : vector<4x256xf32> to vector<256xf32>
    %65 = vector.shape_cast %64 : vector<256xf32> to vector<1x256xf32>
    %cst_31 = arith.constant 4.000000e+00 : f32
    %66 = vector.broadcast %cst_31 : f32 to vector<1x256xf32>
    %67 = arith.divf %65, %66 : vector<1x256xf32>
    %68 = vector.broadcast %60 : vector<1x256xf32> to vector<4x256xf32>
    %69 = arith.subf %56, %68 : vector<4x256xf32>
    %cst_32 = arith.constant 9.99999974E-6 : f32
    %70 = vector.broadcast %cst_32 : f32 to vector<1x256xf32>
    %71 = arith.addf %67, %70 : vector<1x256xf32>
    %72 = math.rsqrt %71 : vector<1x256xf32>
    %73 = vector.broadcast %72 : vector<1x256xf32> to vector<4x256xf32>
    %74 = arith.mulf %69, %73 : vector<4x256xf32>
    %75 = vector.broadcast %8 : vector<4x1xf32> to vector<4x256xf32>
    %76 = arith.mulf %74, %75 : vector<4x256xf32>
    %77 = vector.broadcast %9 : vector<4x1xf32> to vector<4x256xf32>
    %78 = arith.addf %76, %77 : vector<4x256xf32>
    %c0_33 = arith.constant 0 : index
    %c0_34 = arith.constant 0 : index
    %c0_35 = arith.constant 0 : index
    %79 = vector.load %arg8[%c0_33, %c0_34, %c0_35] : memref<1x32x256xf32, #tpu.memory_space<vmem>>, vector<1x32x256xf32>
    %80 = vector.shape_cast %79 : vector<1x32x256xf32> to vector<32x256xf32>
    %81 = vector.shape_cast %25 : vector<32x256xf32> to vector<1x32x256xf32>
    tpu.vector_store %arg8[%c0_33, %c0_34, %c0_35], %81 {strides = array<i32>} : memref<1x32x256xf32, #tpu.memory_space<vmem>>, vector<1x32x256xf32>,
    %c0_36 = arith.constant 0 : index
    %c0_37 = arith.constant 0 : index
    %c0_38 = arith.constant 0 : index
    %82 = vector.load %arg9[%c0_36, %c0_37, %c0_38] : memref<1x4x256xf32, #tpu.memory_space<vmem>>, vector<1x4x256xf32>
    %83 = vector.shape_cast %82 : vector<1x4x256xf32> to vector<4x256xf32>
    %84 = vector.shape_cast %78 : vector<4x256xf32> to vector<1x4x256xf32>
    tpu.vector_store %arg9[%c0_36, %c0_37, %c0_38], %84 {strides = array<i32>} : memref<1x4x256xf32, #tpu.memory_space<vmem>>, vector<1x4x256xf32>,
    return
  }
  func.func @transform_0(%arg0: i32, %arg1: i32) -> (i32, i32, i32) {
    %c0_i32 = arith.constant 0 : i32
    %c0_i32_0 = arith.constant 0 : i32
    return %arg0, %c0_i32, %arg1 : i32, i32, i32
  }
  func.func @transform_1(%arg0: i32, %arg1: i32) -> (i32, i32) {
    %c0_i32 = arith.constant 0 : i32
    %c0_i32_0 = arith.constant 0 : i32
    %c0_i32_1 = arith.constant 0 : i32
    return %c0_i32, %c0_i32_0 : i32, i32
  }
  func.func @transform_2(%arg0: i32, %arg1: i32) -> (i32, i32) {
    %c0_i32 = arith.constant 0 : i32
    %c0_i32_0 = arith.constant 0 : i32
    %c0_i32_1 = arith.constant 0 : i32
    return %c0_i32, %c0_i32_0 : i32, i32
  }
  func.func @transform_3(%arg0: i32, %arg1: i32) -> (i32, i32) {
    %c0_i32 = arith.constant 0 : i32
    %c0_i32_0 = arith.constant 0 : i32
    %c0_i32_1 = arith.constant 0 : i32
    return %c0_i32, %c0_i32_0 : i32, i32
  }
  func.func @transform_4(%arg0: i32, %arg1: i32) -> (i32, i32) {
    %c0_i32 = arith.constant 0 : i32
    %c0_i32_0 = arith.constant 0 : i32
    %c0_i32_1 = arith.constant 0 : i32
    return %c0_i32, %c0_i32_0 : i32, i32
  }
  func.func @transform_5(%arg0: i32, %arg1: i32) -> (i32, i32) {
    %c0_i32 = arith.constant 0 : i32
    %c0_i32_0 = arith.constant 0 : i32
    %c0_i32_1 = arith.constant 0 : i32
    return %c0_i32, %c0_i32_0 : i32, i32
  }
  func.func @transform_6(%arg0: i32, %arg1: i32) -> (i32, i32, i32) {
    %c0_i32 = arith.constant 0 : i32
    %c0_i32_0 = arith.constant 0 : i32
    return %arg0, %c0_i32, %arg1 : i32, i32, i32
  }
  func.func @transform_7(%arg0: i32, %arg1: i32) -> (i32, i32, i32) {
    %c0_i32 = arith.constant 0 : i32
    %c0_i32_0 = arith.constant 0 : i32
    return %arg0, %c0_i32, %arg1 : i32, i32, i32
  }
}

</mosaic_0001>

<llo_original>
// kernel: tpu_custom_call.1
$region0: #{tpu_custom_call.1}
  #allocation0 [shape = 'u32[]', space=smem, size = 0x4, offset = 0x4, fixed_abs, tag = 'smem constant byte address 0x4 - core index']
  #allocation1 [shape = 'u32[144,128]{1,0:T(1,128)}', space=vmem, size = 0x12000, scoped, tag = 'internal scratch']
  %s0 = inlined_call_operand.hbm [shape: f32[2,32,256], index: 0, kind: input, shape index: {}]
  %s1 = inlined_call_operand.vmem [shape: f32[32,32], index: 1, kind: input, shape index: {}]
  %s2 = inlined_call_operand.hbm [shape: f32[32,32], index: 2, kind: input, shape index: {}]
  %s3 = inlined_call_operand.vmem [shape: f32[32,4], index: 3, kind: input, shape index: {}]
  %s4 = inlined_call_operand.vmem [shape: f32[4,32], index: 4, kind: input, shape index: {}]
  %s5 = inlined_call_operand.vmem [shape: f32[4,2], index: 5, kind: input, shape index: {}]
  %s6 = inlined_call_operand.hbm [shape: f32[2,32,256], index: 6, kind: output, shape index: {0}]
  %s7 = inlined_call_operand.hbm [shape: f32[2,4,256], index: 7, kind: output, shape index: {1}]
  %8 = xla_tuple %s6, %s7
  %s9 = sld [smem:[#allocation0]]
  $region73: #{tpu_custom_call.1} parent=0
    _
  %s11 = ssub.s32 1, %s9
  %s12 = scalar_select 0, %s11, %s9
  $region1: #{tpu_custom_call.1} parent=0
    #allocation2 [shape = 'u8[65536]{0}', space=vmem, size = 0x10000, scoped, tag = 'input window, operand 0']
    #allocation3 [shape = 's32[2]{0}', space=sflag, size = 0x8, scoped, tag = 'scoped memory for tpu_custom_call.1']
    #allocation4 [shape = 's32[2]{0}', space=sflag, size = 0x8, scoped, tag = 'scoped memory for tpu_custom_call.1']
    #allocation5 [shape = 'u8[16384]{0}', space=vmem, size = 0x4000, scoped, tag = 'input window, operand 2, single buffered']
    #allocation6 [shape = 's32[1]{0}', space=sflag, size = 0x4, scoped, tag = 'scoped memory for tpu_custom_call.1']
    #allocation7 [shape = 'u8[65536]{0}', space=vmem, size = 0x10000, scoped, tag = 'output window, operand 0']
    #allocation8 [shape = 'u8[8192]{0}', space=vmem, size = 0x2000, scoped, tag = 'output window, operand 1']
    #allocation9 [shape = 's32[2]{0}', space=sflag, size = 0x8, scoped, tag = 'scoped memory for tpu_custom_call.1']
    %13 = vsyncpa [#allocation3], 0
    %s14 = scalar_lea.sflag [#allocation3], 1
    %15 = vsyncpa %s14, 0
    %16 = vsyncpa [#allocation6], 0
    %17 = vsyncpa [#allocation4], 0
    %s18 = scalar_lea.sflag [#allocation4], 1
    %19 = vsyncpa %s18, 0
    %20 = vsyncpa [#allocation9], 0
    %s21 = scalar_lea.sflag [#allocation9], 1
    %22 = vsyncpa %s21, 0
    loop: start=0, step=1, limit=4
    $region2: #{tpu_custom_call.1} parent=1 // loop_pre_header
      _
    $region3: #{tpu_custom_call.1} parent=1 // loop_header
      %s24 = sphi 0, %s28
      %p25 = scmp.ge.s32.totalorder %s24, 4
      %s31 = sphi 0, %s43
      %s32 = sphi 0, %s39
      %s33 = sphi 0, %s31
      %s34 = sphi 0, %s32
      %s35 = sphi 0, %s33
      %s36 = sphi 0, %s34
      %s48 = sphi 0, %s50
      %s51 = sphi 0, %s48
      %s52 = sphi 0, %s51
      %s68 = sphi 0, %s52
      %s72 = sphi 0, %s72
      %s74 = sphi 0, %s72
      %s75 = sphi 0, %s74
      %s89 = sphi 0, %s75
      %s93 = sphi 0, %s93
      %s95 = sphi 0, %s93
      %s96 = sphi 0, %s95
      %s110 = sphi 0, %s96
      %s114 = sphi 0, %s114
      %s116 = sphi 0, %s114
      %s117 = sphi 0, %s116
      %s131 = sphi 0, %s117
      %s135 = sphi 0, %s135
      %s137 = sphi 0, %s135
      %s138 = sphi 0, %s137
      %s152 = sphi 0, %s138
      %s156 = sphi 0, %s156
      %s158 = sphi 0, %s156
      %s159 = sphi 0, %s158
      %s173 = sphi 0, %s159
      %s181 = sphi 0, %s183
      %s184 = sphi 0, %s181
      %s185 = sphi 0, %s184
      %s201 = sphi 0, %s185
      %s209 = sphi 0, %s211
      %s212 = sphi 0, %s209
      %s213 = sphi 0, %s212
      %s229 = sphi 0, %s213
    $region4: #{tpu_custom_call.1} parent=1 // loop_header_branch
      %27 = sbr.rel (%p25) target = $region8
    $region5: #{tpu_custom_call.1} parent=1 // loop_body
      %s29 = ssub.s32 %s24, 1
      %s30 = ssub.s32 %s24, 2
      %s37 = sadd.s32 1, %s32
      %p38 = scmp.ge.s32.totalorder %s37, 1
      %s39 = scalar_select %p38, 0, %s37
      %s40 = sadd.s32 1, %s31
      %s41 = scalar_select %p38, %s40, %s31
      %p42 = scmp.ge.s32.totalorder %s41, 2
      %s43 = scalar_select %p42, 0, %s41
      %s44 = ssub.s32 %s31, %s43
      %s45 = ssub.s32 %s32, %s39
      %s46 = sor.u32 %s44, %s45
      %p47 = scmp.eq.s32.totalorder %s46, 0
      %s49 = sadd.s32 %s48, 1
      %s50 = scalar_select %p47, %s48, %s49
      %p53 = pneg %p47
      %p54 = scmp.eq.s32.totalorder %s24, 1
      %p55 = por %p53, %p54
      %p56 = scmp.ne.s32.totalorder %s48, %s51
      %p57 = scmp.eq.s32.totalorder %s24, 0
      %p58 = por %p56, %p57
      %p59 = scmp.ne.s32.totalorder %s48, %s51
      %p60 = scmp.eq.s32.totalorder %s29, 1
      %p61 = por %p59, %p60
      %p62 = scmp.ne.s32.totalorder %s51, %s52
      %p63 = scmp.eq.s32.totalorder %s29, 0
      %p64 = por %p62, %p63
      %p65 = scmp.ne.s32.totalorder %s51, %s52
      %p66 = scmp.eq.s32.totalorder %s30, 1
      %p67 = por %p65, %p66
      %p69 = scmp.ne.s32.totalorder %s52, %s68
      %p70 = scmp.eq.s32.totalorder %s30, 0
      %p71 = por %p69, %p70
      %s73 = sadd.s32 %s72, 1
      %p76 = scmp.eq.s32.totalorder %s24, 1
      %p77 = scmp.ne.s32.totalorder %s72, %s74
      %p78 = scmp.eq.s32.totalorder %s24, 0
      %p79 = por %p77, %p78
      %p80 = scmp.ne.s32.totalorder %s72, %s74
      %p81 = scmp.eq.s32.totalorder %s29, 1
      %p82 = por %p80, %p81
      %p83 = scmp.ne.s32.totalorder %s74, %s75
      %p84 = scmp.eq.s32.totalorder %s29, 0
      %p85 = por %p83, %p84
      %p86 = scmp.ne.s32.totalorder %s74, %s75
      %p87 = scmp.eq.s32.totalorder %s30, 1
      %p88 = por %p86, %p87
      %p90 = scmp.ne.s32.totalorder %s75, %s89
      %p91 = scmp.eq.s32.totalorder %s30, 0
      %p92 = por %p90, %p91
      %s94 = sadd.s32 %s93, 1
      %p97 = scmp.eq.s32.totalorder %s24, 1
      %p98 = scmp.ne.s32.totalorder %s93, %s95
      %p99 = scmp.eq.s32.totalorder %s24, 0
      %p100 = por %p98, %p99
      %p101 = scmp.ne.s32.totalorder %s93, %s95
      %p102 = scmp.eq.s32.totalorder %s29, 1
      %p103 = por %p101, %p102
      %p104 = scmp.ne.s32.totalorder %s95, %s96
      %p105 = scmp.eq.s32.totalorder %s29, 0
      %p106 = por %p104, %p105
      %p107 = scmp.ne.s32.totalorder %s95, %s96
      %p108 = scmp.eq.s32.totalorder %s30, 1
      %p109 = por %p107, %p108
      %p111 = scmp.ne.s32.totalorder %s96, %s110
      %p112 = scmp.eq.s32.totalorder %s30, 0
      %p113 = por %p111, %p112
      %s115 = sadd.s32 %s114, 1
      %p118 = scmp.eq.s32.totalorder %s24, 1
      %p119 = scmp.ne.s32.totalorder %s114, %s116
      %p120 = scmp.eq.s32.totalorder %s24, 0
      %p121 = por %p119, %p120
      %p122 = scmp.ne.s32.totalorder %s114, %s116
      %p123 = scmp.eq.s32.totalorder %s29, 1
      %p124 = por %p122, %p123
      %p125 = scmp.ne.s32.totalorder %s116, %s117
      %p126 = scmp.eq.s32.totalorder %s29, 0
      %p127 = por %p125, %p126
      %p128 = scmp.ne.s32.totalorder %s116, %s117
      %p129 = scmp.eq.s32.totalorder %s30, 1
      %p130 = por %p128, %p129
      %p132 = scmp.ne.s32.totalorder %s117, %s131
      %p133 = scmp.eq.s32.totalorder %s30, 0
      %p134 = por %p132, %p133
      %s136 = sadd.s32 %s135, 1
      %p139 = scmp.eq.s32.totalorder %s24, 1
      %p140 = scmp.ne.s32.totalorder %s135, %s137
      %p141 = scmp.eq.s32.totalorder %s24, 0
      %p142 = por %p140, %p141
      %p143 = scmp.ne.s32.totalorder %s135, %s137
      %p144 = scmp.eq.s32.totalorder %s29, 1
      %p145 = por %p143, %p144
      %p146 = scmp.ne.s32.totalorder %s137, %s138
      %p147 = scmp.eq.s32.totalorder %s29, 0
      %p148 = por %p146, %p147
      %p149 = scmp.ne.s32.totalorder %s137, %s138
      %p150 = scmp.eq.s32.totalorder %s30, 1
      %p151 = por %p149, %p150
      %p153 = scmp.ne.s32.totalorder %s138, %s152
      %p154 = scmp.eq.s32.totalorder %s30, 0
      %p155 = por %p153, %p154
      %s157 = sadd.s32 %s156, 1
      %p160 = scmp.eq.s32.totalorder %s24, 1
      %p161 = scmp.ne.s32.totalorder %s156, %s158
      %p162 = scmp.eq.s32.totalorder %s24, 0
      %p163 = por %p161, %p162
      %p164 = scmp.ne.s32.totalorder %s156, %s158
      %p165 = scmp.eq.s32.totalorder %s29, 1
      %p166 = por %p164, %p165
      %p167 = scmp.ne.s32.totalorder %s158, %s159
      %p168 = scmp.eq.s32.totalorder %s29, 0
      %p169 = por %p167, %p168
      %p170 = scmp.ne.s32.totalorder %s158, %s159
      %p171 = scmp.eq.s32.totalorder %s30, 1
      %p172 = por %p170, %p171
      %p174 = scmp.ne.s32.totalorder %s159, %s173
      %p175 = scmp.eq.s32.totalorder %s30, 0
      %p176 = por %p174, %p175
      %s177 = ssub.s32 %s31, %s43
      %s178 = ssub.s32 %s32, %s39
      %s179 = sor.u32 %s177, %s178
      %p180 = scmp.eq.s32.totalorder %s179, 0
      %s182 = sadd.s32 %s181, 1
      %s183 = scalar_select %p180, %s181, %s182
      %p186 = pneg %p180
      %p187 = scmp.eq.s32.totalorder %s24, 1
      %p188 = por %p186, %p187
      %p189 = scmp.ne.s32.totalorder %s181, %s184
      %p190 = scmp.eq.s32.totalorder %s24, 0
      %p191 = por %p189, %p190
      %p192 = scmp.ne.s32.totalorder %s181, %s184
      %p193 = scmp.eq.s32.totalorder %s29, 1
      %p194 = por %p192, %p193
      %p195 = scmp.ne.s32.totalorder %s184, %s185
      %p196 = scmp.eq.s32.totalorder %s29, 0
      %p197 = por %p195, %p196
      %p198 = scmp.ne.s32.totalorder %s184, %s185
      %p199 = scmp.eq.s32.totalorder %s30, 1
      %p200 = por %p198, %p199
      %p202 = scmp.ne.s32.totalorder %s185, %s201
      %p203 = scmp.eq.s32.totalorder %s30, 0
      %p204 = por %p202, %p203
      %s205 = ssub.s32 %s31, %s43
      %s206 = ssub.s32 %s32, %s39
      %s207 = sor.u32 %s205, %s206
      %p208 = scmp.eq.s32.totalorder %s207, 0
      %s210 = sadd.s32 %s209, 1
      %s211 = scalar_select %p208, %s209, %s210
      %p214 = pneg %p208
      %p215 = scmp.eq.s32.totalorder %s24, 1
      %p216 = por %p214, %p215
      %p217 = scmp.ne.s32.totalorder %s209, %s212
      %p218 = scmp.eq.s32.totalorder %s24, 0
      %p219 = por %p217, %p218
      %p220 = scmp.ne.s32.totalorder %s209, %s212
      %p221 = scmp.eq.s32.totalorder %s29, 1
      %p222 = por %p220, %p221
      %p223 = scmp.ne.s32.totalorder %s212, %s213
      %p224 = scmp.eq.s32.totalorder %s29, 0
      %p225 = por %p223, %p224
      %p226 = scmp.ne.s32.totalorder %s212, %s213
      %p227 = scmp.eq.s32.totalorder %s30, 1
      %p228 = por %p226, %p227
      %p230 = scmp.ne.s32.totalorder %s213, %s229
      %p231 = scmp.eq.s32.totalorder %s30, 0
      %p232 = por %p230, %p231
      %p233 = scmp.le.s32.totalorder 1, %s24
      %p234 = scmp.lt.s32.totalorder %s24, 3
      %p235 = pnand %p233, %p234
      %p236 = pneg %p235
      // Predicated region
      $region9: #{tpu_custom_call.1} parent=5 // pred_check
        _
      $region10: #{tpu_custom_call.1} parent=5 // pred_check_branch
        %238 = sbr.rel (%p235) target = $region12
      $region11: #{tpu_custom_call.1} parent=5 // pred_region
        %s239 = ssub.s32 %s24, 1
        // Predicated region
        $region13: #{tpu_custom_call.1} parent=11 // pred_check
          %p240 = pneg %p85
        $region14: #{tpu_custom_call.1} parent=11 // pred_check_branch
          %242 = sbr.rel (%p240) target = $region16
        $region15: #{tpu_custom_call.1} parent=11 // pred_region
          _
        $region16: #{tpu_custom_call.1} parent=11 // pred_fallthru
          _
        // Predicated region
        $region17: #{tpu_custom_call.1} parent=11 // pred_check
          %p243 = pneg %p106
        $region18: #{tpu_custom_call.1} parent=11 // pred_check_branch
          %245 = sbr.rel (%p243) target = $region20
        $region19: #{tpu_custom_call.1} parent=11 // pred_region
          %s247 = ssub.s32 512, 512
          %248 = vsyncadd [#allocation6], %s247
          %s249 = sshll.u32 [#allocation5], 4
          %s250 = int_to_ptr.vmem [resolvable:$true] %s249
          %255 = dma.hbm_to_vmem [thread:$0]  %s2, 512, %s250, [#allocation6], 128, 128, 8
        $region20: #{tpu_custom_call.1} parent=11 // pred_fallthru
          _
        // Predicated region
        $region21: #{tpu_custom_call.1} parent=11 // pred_check
          %p256 = pneg %p127
        $region22: #{tpu_custom_call.1} parent=11 // pred_check_branch
          %258 = sbr.rel (%p256) target = $region24
        $region23: #{tpu_custom_call.1} parent=11 // pred_region
          _
        $region24: #{tpu_custom_call.1} parent=11 // pred_fallthru
          _
        // Predicated region
        $region25: #{tpu_custom_call.1} parent=11 // pred_check
          %p259 = pneg %p148
        $region26: #{tpu_custom_call.1} parent=11 // pred_check_branch
          %261 = sbr.rel (%p259) target = $region28
        $region27: #{tpu_custom_call.1} parent=11 // pred_region
          _
        $region28: #{tpu_custom_call.1} parent=11 // pred_fallthru
          _
        // Predicated region
        $region29: #{tpu_custom_call.1} parent=11 // pred_check
          %p262 = pneg %p169
        $region30: #{tpu_custom_call.1} parent=11 // pred_check_branch
          %264 = sbr.rel (%p262) target = $region32
        $region31: #{tpu_custom_call.1} parent=11 // pred_region
          _
        $region32: #{tpu_custom_call.1} parent=11 // pred_fallthru
          _
      $region12: #{tpu_custom_call.1} parent=5 // pred_fallthru
        _
      %p265 = scmp.lt.s32.totalorder %s24, 2
      // Predicated region
      $region33: #{tpu_custom_call.1} parent=5 // pred_check
        %p266 = pneg %p265
      $region34: #{tpu_custom_call.1} parent=5 // pred_check_branch
        %268 = sbr.rel (%p266) target = $region36
      $region35: #{tpu_custom_call.1} parent=5 // pred_region
        // Predicated region
        $region37: #{tpu_custom_call.1} parent=35 // pred_check
          %p269 = pneg %p58
        $region38: #{tpu_custom_call.1} parent=35 // pred_check_branch
          %271 = sbr.rel (%p269) target = $region40
        $region39: #{tpu_custom_call.1} parent=35 // pred_region
          %s272 = sand.u32 %s48, 1
          %s273 = scalar_lea.sflag [#allocation3], %s272
          %s274 = sand.u32 %s48, 1
          %s275 = smul.addr %s274, 64
          %s276 = scalar_lea.vmem [#allocation2], %s275
          %s277 = smul.u32 2, %s32
          %s279 = ssub.s32 1024, 1024
          %280 = vsyncadd %s273, %s279
          %s281 = smul.addr %s31, 8
          %s282 = sadd.s32 %s277, %s281
          %s283 = smul.addr %s282, 128
          %s284 = scalar_lea.hbm %s0, %s283
          %s285 = sshll.u32 %s276, 4
          %s286 = int_to_ptr.vmem [resolvable:$true] %s285
          %291 = dma.hbm_to_vmem [thread:$0]  %s284, 1024, %s286, %s273, 256, 256, 16
        $region40: #{tpu_custom_call.1} parent=35 // pred_fallthru
          _
      $region36: #{tpu_custom_call.1} parent=5 // pred_fallthru
        _
      %p292 = scmp.le.s32.totalorder 1, %s24
      %p293 = scmp.lt.s32.totalorder %s24, 3
      %p294 = pnand %p292, %p293
      %p295 = pneg %p294
      // Predicated region
      $region41: #{tpu_custom_call.1} parent=5 // pred_check
        _
      $region42: #{tpu_custom_call.1} parent=5 // pred_check_branch
        %297 = sbr.rel (%p294) target = $region44
      $region43: #{tpu_custom_call.1} parent=5 // pred_region
        %s298 = ssub.s32 %s24, 1
        %s299 = sand.u32 %s51, 1
        %s300 = scalar_lea.sflag [#allocation3], %s299
        %s301 = sand.u32 %s51, 1
        %s302 = smul.addr %s301, 64
        %s303 = scalar_lea.vmem [#allocation2], %s302
        // Predicated region
        $region45: #{tpu_custom_call.1} parent=43 // pred_check
          %p304 = pneg %p64
        $region46: #{tpu_custom_call.1} parent=43 // pred_check_branch
          %306 = sbr.rel (%p304) target = $region48
        $region47: #{tpu_custom_call.1} parent=43 // pred_region
          %307 = dma.done %s300, 1024
        $region48: #{tpu_custom_call.1} parent=43 // pred_fallthru
          _
        // Predicated region
        $region49: #{tpu_custom_call.1} parent=43 // pred_check
          %p308 = pneg %p106
        $region50: #{tpu_custom_call.1} parent=43 // pred_check_branch
          %310 = sbr.rel (%p308) target = $region52
        $region51: #{tpu_custom_call.1} parent=43 // pred_region
          %311 = dma.done [#allocation6], 512
        $region52: #{tpu_custom_call.1} parent=43 // pred_fallthru
          _
        %s312 = sand.u32 %s51, 1
        %s313 = scalar_lea.sflag [#allocation3], %s312
        %s314 = sand.u32 %s51, 1
        %s315 = smul.addr %s314, 64
        %s316 = scalar_lea.vmem [#allocation2], %s315
        %p317 = pneg %p64
        %p318 = pneg %p61
        %p319 = pneg %p85
        %p320 = pneg %p82
        %p321 = pneg %p106
        %p322 = pneg %p103
        %p323 = pneg %p127
        %p324 = pneg %p124
        %p325 = pneg %p148
        %p326 = pneg %p145
        %p327 = pneg %p169
        %p328 = pneg %p166
        %p329 = pneg %p197
        %p330 = pneg %p194
        %s331 = sand.u32 %s184, 1
        %s332 = scalar_lea.sflag [#allocation4], %s331
        %s333 = sand.u32 %s184, 1
        %s334 = smul.addr %s333, 64
        %s335 = scalar_lea.vmem [#allocation7], %s334
        %p336 = pneg %p225
        %p337 = pneg %p222
        %s338 = sand.u32 %s212, 1
        %s339 = scalar_lea.sflag [#allocation9], %s338
        %s340 = sand.u32 %s212, 1
        %s341 = smul.addr %s340, 8
        %s342 = scalar_lea.vmem [#allocation8], %s341
        %s343 = smul.u32 2, %s34
        %s344 = smul.u32 2, %s34
        %s345 = smul.u32 2, %s34
        %v346 = vld [vmem:[%s303] sm:$0xff]
        %v347 = vld [vmem:[%s303 + $0x8] sm:$0xff]
        %v348 = vld [vmem:[%s303 + $0x10] sm:$0xff]
        %v349 = vld [vmem:[%s303 + $0x18] sm:$0xff]
        %v350 = vld [vmem:[%s303 + $0x20] sm:$0xff]
        %v351 = vld [vmem:[%s303 + $0x28] sm:$0xff]
        %v352 = vld [vmem:[%s303 + $0x30] sm:$0xff]
        %v353 = vld [vmem:[%s303 + $0x38] sm:$0xff]
        %v354 = vld [vmem:[%s1] sm:$0xff]
        %v355 = vld [vmem:[%s1 + $0x8] sm:$0xff]
        %v356 = vld [vmem:[%s1 + $0x10] sm:$0xff]
        %v357 = vld [vmem:[%s1 + $0x18] sm:$0xff]
        %v358 = vld [vmem:[#allocation5] sm:$0xff]
        %v359 = vld [vmem:[#allocation5 + $0x8] sm:$0xff]
        %v360 = vld [vmem:[#allocation5 + $0x10] sm:$0xff]
        %v361 = vld [vmem:[#allocation5 + $0x18] sm:$0xff]
        %v362 = vld [vmem:[%s3] sm:$0xff]
        %v363 = vld [vmem:[%s3 + $0x8] sm:$0xff]
        %v364 = vld [vmem:[%s3 + $0x10] sm:$0xff]
        %v365 = vld [vmem:[%s3 + $0x18] sm:$0xff]
        %v366 = vld [vmem:[%s5] sm:$0xf]
        %368 = vset.pattern.permute.xlu0 0
        %369 = vperm.xlu0 %368, %v362
        %v370 = vpop.permute.xlu0 %369
        %373 = vset.pattern.permute.xlu0 0
        %374 = vperm.xlu0 %373, %v363
        %v375 = vpop.permute.xlu0 %374
        %378 = vset.pattern.permute.xlu0 0
        %379 = vperm.xlu0 %378, %v364
        %v380 = vpop.permute.xlu0 %379
        %383 = vset.pattern.permute.xlu0 0
        %384 = vperm.xlu0 %383, %v365
        %v385 = vpop.permute.xlu0 %384
        %vm387 = vcmask 261120
        %v389 = vsel %vm387, %v354, 0
        %v392 = vsel %vm387, %v355, 0
        %v395 = vsel %vm387, %v356, 0
        %v398 = vsel %vm387, %v357, 0
        %400 = vmatprep.subr.mxu0 %v347
        %401 = vmatpush1.msra.mxu0 %v346
        %402 = vmatprep.subr.mxu0 %v349
        %403 = vmatpush1.msra.mxu0 %v348
        %404 = vmatprep.subr.mxu0 %v351
        %405 = vmatpush1.msra.mxu0 %v350
        %406 = vmatprep.subr.mxu0 %v353
        %407 = vmatpush1.msra.mxu0 %v352
        %408 = vmatprep.subr.mxu0 0.0
        %409 = vmatpush1.msra.mxu0 0.0
        %410 = vmatprep.subr.mxu0 0.0
        %411 = vmatpush1.msra.mxu0 0.0
        %412 = vmatprep.subr.mxu0 0.0
        %413 = vmatpush1.msra.mxu0 0.0
        %414 = vmatprep.subr.mxu0 0.0
        %415 = vmatpush1.msra.mxu0 0.0
        %416 = vmatprep.subr.mxu0 0.0
        %417 = vmatpush1.msra.mxu0 0.0
        %418 = vmatprep.subr.mxu0 0.0
        %419 = vmatpush1.msra.mxu0 0.0
        %420 = vmatprep.subr.mxu0 0.0
        %421 = vmatpush1.msra.mxu0 0.0
        %422 = vmatprep.subr.mxu0 0.0
        %423 = vmatpush1.msra.mxu0 0.0
        %424 = vmatprep.subr.mxu0 0.0
        %425 = vmatpush1.msra.mxu0 0.0
        %426 = vmatprep.subr.mxu0 0.0
        %427 = vmatpush1.msra.mxu0 0.0
        %428 = vmatprep.subr.mxu0 0.0
        %429 = vmatpush1.msra.mxu0 0.0
        %430 = vmatprep.subr.mxu0 0.0
        %431 = vmatpush1.msra.mxu0 0.0
        %432 = vmatprep.subr.mxu0 0.0
        %433 = vmatpush1.msra.mxu0 0.0
        %434 = vmatprep.subr.mxu0 0.0
        %435 = vmatpush1.msra.mxu0 0.0
        %436 = vmatprep.subr.mxu0 0.0
        %437 = vmatpush1.msra.mxu0 0.0
        %438 = vmatprep.subr.mxu0 0.0
        %439 = vmatpush1.msra.mxu0 0.0
        %440 = vmatprep.subr.mxu0 0.0
        %441 = vmatpush1.msra.mxu0 0.0
        %442 = vmatprep.subr.mxu0 0.0
        %443 = vmatpush1.msra.mxu0 0.0
        %444 = vmatprep.subr.mxu0 0.0
        %445 = vmatpush1.msra.mxu0 0.0
        %446 = vmatprep.subr.mxu0 0.0
        %447 = vmatpush1.msra.mxu0 0.0
        %448 = vmatprep.subr.mxu0 0.0
        %449 = vmatpush1.msra.mxu0 0.0
        %450 = vmatprep.subr.mxu0 0.0
        %451 = vmatpush1.msra.mxu0 0.0
        %452 = vmatprep.subr.mxu0 0.0
        %453 = vmatpush1.msra.mxu0 0.0
        %454 = vmatprep.subr.mxu0 0.0
        %455 = vmatpush1.msra.mxu0 0.0
        %456 = vmatprep.subr.mxu0 0.0
        %457 = vmatpush1.msra.mxu0 0.0
        %458 = vmatprep.subr.mxu0 0.0
        %459 = vmatpush1.msra.mxu0 0.0
        %460 = vmatprep.subr.mxu0 0.0
        %461 = vmatpush1.msra.mxu0 0.0
        %462 = vmatprep.subr.mxu0 0.0
        %463 = vmatpush1.msra.mxu0 0.0
        %464 = vmatprep.mubr.f32.mxu0 0.0
        %465 = vmatmul.mubr.f32.gmra.mrb[0].mxu0 %v389
        %v466 = vpop.f32.mrb[0].mxu0
        %v467 = vadd.f32 %v370, %v466
        %v468 = vpop.f32.mrb[0].mxu0
        %v469 = vadd.f32 %v370, %v468
        %470 = vmatprep.mubr.f32.mxu0 0.0
        %471 = vmatmul.mubr.f32.gmra.mrb[0].mxu0 %v392
        %v472 = vpop.f32.mrb[0].mxu0
        %v473 = vadd.f32 %v375, %v472
        %v474 = vpop.f32.mrb[0].mxu0
        %v475 = vadd.f32 %v375, %v474
        %476 = vmatprep.mubr.f32.mxu0 0.0
        %477 = vmatmul.mubr.f32.gmra.mrb[0].mxu0 %v395
        %v478 = vpop.f32.mrb[0].mxu0
        %v479 = vadd.f32 %v380, %v478
        %v480 = vpop.f32.mrb[0].mxu0
        %v481 = vadd.f32 %v380, %v480
        %482 = vmatprep.mubr.f32.mxu0 0.0
        %483 = vmatmul.mubr.f32.gmra.mrb[0].mxu0 %v398
        %v484 = vpop.f32.mrb[0].mxu0
        %v485 = vadd.f32 %v385, %v484
        %v486 = vpop.f32.mrb[0].mxu0
        %v487 = vadd.f32 %v385, %v486
        %488 = vdwg.mxu0
        %v489 = vmax.f32 %v467, 0.0
        %v490 = vmax.f32 %v469, 0.0
        %v491 = vmax.f32 %v473, 0.0
        %v492 = vmax.f32 %v475, 0.0
        %v493 = vmax.f32 %v479, 0.0
        %v494 = vmax.f32 %v481, 0.0
        %v495 = vmax.f32 %v485, 0.0
        %v496 = vmax.f32 %v487, 0.0
        %497 = vset.pattern.permute.xlu0 1
        %498 = vperm.xlu0 %497, %v362
        %v499 = vpop.permute.xlu0 %498
        %501 = vset.pattern.permute.xlu0 1
        %502 = vperm.xlu0 %501, %v363
        %v503 = vpop.permute.xlu0 %502
        %505 = vset.pattern.permute.xlu0 1
        %506 = vperm.xlu0 %505, %v364
        %v507 = vpop.permute.xlu0 %506
        %509 = vset.pattern.permute.xlu0 1
        %510 = vperm.xlu0 %509, %v365
        %v511 = vpop.permute.xlu0 %510
        %v514 = vsel %vm387, %v358, 0
        %v517 = vsel %vm387, %v359, 0
        %v520 = vsel %vm387, %v360, 0
        %v523 = vsel %vm387, %v361, 0
        %525 = vmatprep.subr.mxu0 %v490
        %526 = vmatpush1.msra.mxu0 %v489
        %527 = vmatprep.subr.mxu0 %v492
        %528 = vmatpush1.msra.mxu0 %v491
        %529 = vmatprep.subr.mxu0 %v494
        %530 = vmatpush1.msra.mxu0 %v493
        %531 = vmatprep.subr.mxu0 %v496
        %532 = vmatpush1.msra.mxu0 %v495
        %533 = vmatprep.subr.mxu0 0.0
        %534 = vmatpush1.msra.mxu0 0.0
        %535 = vmatprep.subr.mxu0 0.0
        %536 = vmatpush1.msra.mxu0 0.0
        %537 = vmatprep.subr.mxu0 0.0
        %538 = vmatpush1.msra.mxu0 0.0
        %539 = vmatprep.subr.mxu0 0.0
        %540 = vmatpush1.msra.mxu0 0.0
        %541 = vmatprep.subr.mxu0 0.0
        %542 = vmatpush1.msra.mxu0 0.0
        %543 = vmatprep.subr.mxu0 0.0
        %544 = vmatpush1.msra.mxu0 0.0
        %545 = vmatprep.subr.mxu0 0.0
        %546 = vmatpush1.msra.mxu0 0.0
        %547 = vmatprep.subr.mxu0 0.0
        %548 = vmatpush1.msra.mxu0 0.0
        %549 = vmatprep.subr.mxu0 0.0
        %550 = vmatpush1.msra.mxu0 0.0
        %551 = vmatprep.subr.mxu0 0.0
        %552 = vmatpush1.msra.mxu0 0.0
        %553 = vmatprep.subr.mxu0 0.0
        %554 = vmatpush1.msra.mxu0 0.0
        %555 = vmatprep.subr.mxu0 0.0
        %556 = vmatpush1.msra.mxu0 0.0
        %557 = vmatprep.subr.mxu0 0.0
        %558 = vmatpush1.msra.mxu0 0.0
        %559 = vmatprep.subr.mxu0 0.0
        %560 = vmatpush1.msra.mxu0 0.0
        %561 = vmatprep.subr.mxu0 0.0
        %562 = vmatpush1.msra.mxu0 0.0
        %563 = vmatprep.subr.mxu0 0.0
        %564 = vmatpush1.msra.mxu0 0.0
        %565 = vmatprep.subr.mxu0 0.0
        %566 = vmatpush1.msra.mxu0 0.0
        %567 = vmatprep.subr.mxu0 0.0
        %568 = vmatpush1.msra.mxu0 0.0
        %569 = vmatprep.subr.mxu0 0.0
        %570 = vmatpush1.msra.mxu0 0.0
        %571 = vmatprep.subr.mxu0 0.0
        %572 = vmatpush1.msra.mxu0 0.0
        %573 = vmatprep.subr.mxu0 0.0
        %574 = vmatpush1.msra.mxu0 0.0
        %575 = vmatprep.subr.mxu0 0.0
        %576 = vmatpush1.msra.mxu0 0.0
        %577 = vmatprep.subr.mxu0 0.0
        %578 = vmatpush1.msra.mxu0 0.0
        %579 = vmatprep.subr.mxu0 0.0
        %580 = vmatpush1.msra.mxu0 0.0
        %581 = vmatprep.subr.mxu0 0.0
        %582 = vmatpush1.msra.mxu0 0.0
        %583 = vmatprep.subr.mxu0 0.0
        %584 = vmatpush1.msra.mxu0 0.0
        %585 = vmatprep.subr.mxu0 0.0
        %586 = vmatpush1.msra.mxu0 0.0
        %587 = vmatprep.subr.mxu0 0.0
        %588 = vmatpush1.msra.mxu0 0.0
        %589 = vmatprep.mubr.f32.mxu0 0.0
        %590 = vmatmul.mubr.f32.gmra.mrb[0].mxu0 %v514
        %v591 = vpop.f32.mrb[0].mxu0
        %v592 = vadd.f32 %v499, %v591
        %v593 = vpop.f32.mrb[0].mxu0
        %v594 = vadd.f32 %v499, %v593
        %595 = vmatprep.mubr.f32.mxu0 0.0
        %596 = vmatmul.mubr.f32.gmra.mrb[0].mxu0 %v517
        %v597 = vpop.f32.mrb[0].mxu0
        %v598 = vadd.f32 %v503, %v597
        %v599 = vpop.f32.mrb[0].mxu0
        %v600 = vadd.f32 %v503, %v599
        %601 = vmatprep.mubr.f32.mxu0 0.0
        %602 = vmatmul.mubr.f32.gmra.mrb[0].mxu0 %v520
        %v603 = vpop.f32.mrb[0].mxu0
        %v604 = vadd.f32 %v507, %v603
        %v605 = vpop.f32.mrb[0].mxu0
        %v606 = vadd.f32 %v507, %v605
        %607 = vmatprep.mubr.f32.mxu0 0.0
        %608 = vmatmul.mubr.f32.gmra.mrb[0].mxu0 %v523
        %v609 = vpop.f32.mrb[0].mxu0
        %v610 = vadd.f32 %v511, %v609
        %v611 = vpop.f32.mrb[0].mxu0
        %v612 = vadd.f32 %v511, %v611
        %613 = vdwg.mxu0
        %v614 = vmul.f32 %v592, %v592
        %v615 = vmul.f32 %v594, %v594
        %v616 = vmul.f32 %v598, %v598
        %v617 = vmul.f32 %v600, %v600
        %v618 = vmul.f32 %v604, %v604
        %v619 = vmul.f32 %v606, %v606
        %v620 = vmul.f32 %v610, %v610
        %v621 = vmul.f32 %v612, %v612
        %v622 = vadd.f32 %v614, %v616
        %v623 = vadd.f32 %v622, %v618
        %v624 = vadd.f32 %v623, %v620
        %v625 = vrot.slane %v624, 4
        %v626 = vadd.f32 %v624, %v625
        %v627 = vrot.slane %v626, 2
        %v628 = vadd.f32 %v626, %v627
        %v629 = vrot.slane %v628, 1
        %v630 = vadd.f32 %v628, %v629
        %v631 = vadd.f32 %v615, %v617
        %v632 = vadd.f32 %v631, %v619
        %v633 = vadd.f32 %v632, %v621
        %v634 = vrot.slane %v633, 4
        %v635 = vadd.f32 %v633, %v634
        %v636 = vrot.slane %v635, 2
        %v637 = vadd.f32 %v635, %v636
        %v638 = vrot.slane %v637, 1
        %v639 = vadd.f32 %v637, %v638
        %v640 = vmax.f32 %v630, 1e-24
        %v641 = vmax.f32 %v639, 1e-24
        %v642 = vrsqrt.pop %v640
        %v643 = vrsqrt.pop %v641
        %v644 = vmul.f32 %v592, %v642
        %v645 = vmul.f32 %v594, %v643
        %v646 = vmul.f32 %v598, %v642
        %v647 = vmul.f32 %v600, %v643
        %v648 = vmul.f32 %v604, %v642
        %v649 = vmul.f32 %v606, %v643
        %v650 = vmul.f32 %v610, %v642
        %v651 = vmul.f32 %v612, %v643
        %v652 = vmul.f32 %v642, %v642
        %v653 = vmul.f32 %v643, %v643
        %v654 = vmul.f32 %v630, %v652
        %v655 = vmul.f32 %v639, %v653
        %v656 = vadd.f32 %v644, %v646
        %v657 = vadd.f32 %v656, %v648
        %v658 = vadd.f32 %v657, %v650
        %v659 = vrot.slane %v658, 4
        %v660 = vadd.f32 %v658, %v659
        %v661 = vrot.slane %v660, 2
        %v662 = vadd.f32 %v660, %v661
        %v663 = vrot.slane %v662, 1
        %v664 = vadd.f32 %v662, %v663
        %v665 = vadd.f32 %v645, %v647
        %v666 = vadd.f32 %v665, %v649
        %v667 = vadd.f32 %v666, %v651
        %v668 = vrot.slane %v667, 4
        %v669 = vadd.f32 %v667, %v668
        %v670 = vrot.slane %v669, 2
        %v671 = vadd.f32 %v669, %v670
        %v672 = vrot.slane %v671, 1
        %v673 = vadd.f32 %v671, %v672
        %v674 = vrcp.pop 32.0
        %v675 = vmul.f32 %v664, %v674
        %v676 = vmul.f32 %v673, %v674
        %v677 = vmul.f32 %v654, 0.03125
        %v678 = vmul.f32 %v655, 0.03125
        %v679 = vmul.f32 %v675, %v675
        %v680 = vmul.f32 %v676, %v676
        %v681 = vsub.f32 %v677, %v679
        %v682 = vsub.f32 %v678, %v680
        %v683 = vsub.f32 %v644, %v675
        %v684 = vsub.f32 %v645, %v676
        %v685 = vsub.f32 %v646, %v675
        %v686 = vsub.f32 %v647, %v676
        %v687 = vsub.f32 %v648, %v675
        %v688 = vsub.f32 %v649, %v676
        %v689 = vsub.f32 %v650, %v675
        %v690 = vsub.f32 %v651, %v676
        %v691 = vadd.f32 %v681, 1e-05
        %v692 = vadd.f32 %v682, 1e-05
        %v693 = vrsqrt.pop %v691
        %v694 = vrsqrt.pop %v692
        %v695 = vmul.f32 %v683, %v693
        %v696 = vmul.f32 %v684, %v694
        %v697 = vmul.f32 %v685, %v693
        %v698 = vmul.f32 %v686, %v694
        %v699 = vmul.f32 %v687, %v693
        %v700 = vmul.f32 %v688, %v694
        %v701 = vmul.f32 %v689, %v693
        %v702 = vmul.f32 %v690, %v694
        %703 = vset.pattern.permute.xlu0 2
        %704 = vperm.xlu0 %703, %v362
        %v705 = vpop.permute.xlu0 %704
        %707 = vset.pattern.permute.xlu0 2
        %708 = vperm.xlu0 %707, %v363
        %v709 = vpop.permute.xlu0 %708
        %711 = vset.pattern.permute.xlu0 2
        %712 = vperm.xlu0 %711, %v364
        %v713 = vpop.permute.xlu0 %712
        %715 = vset.pattern.permute.xlu0 2
        %716 = vperm.xlu0 %715, %v365
        %v717 = vpop.permute.xlu0 %716
        %v719 = vmul.f32 %v695, %v705
        %v720 = vmul.f32 %v696, %v705
        %v721 = vmul.f32 %v697, %v709
        %v722 = vmul.f32 %v698, %v709
        %v723 = vmul.f32 %v699, %v713
        %v724 = vmul.f32 %v700, %v713
        %v725 = vmul.f32 %v701, %v717
        %v726 = vmul.f32 %v702, %v717
        %727 = vset.pattern.permute.xlu0 3
        %728 = vperm.xlu0 %727, %v362
        %v729 = vpop.permute.xlu0 %728
        %731 = vset.pattern.permute.xlu0 3
        %732 = vperm.xlu0 %731, %v363
        %v733 = vpop.permute.xlu0 %732
        %735 = vset.pattern.permute.xlu0 3
        %736 = vperm.xlu0 %735, %v364
        %v737 = vpop.permute.xlu0 %736
        %739 = vset.pattern.permute.xlu0 3
        %740 = vperm.xlu0 %739, %v365
        %v741 = vpop.permute.xlu0 %740
        %v743 = vadd.f32 %v719, %v729
        %v744 = vadd.f32 %v720, %v729
        %v745 = vadd.f32 %v721, %v733
        %v746 = vadd.f32 %v722, %v733
        %v747 = vadd.f32 %v723, %v737
        %v748 = vadd.f32 %v724, %v737
        %v749 = vadd.f32 %v725, %v741
        %v750 = vadd.f32 %v726, %v741
        %v751 = vmul.f32 %v743, %v743
        %v752 = vmul.f32 %v744, %v744
        %v753 = vmul.f32 %v745, %v745
        %v754 = vmul.f32 %v746, %v746
        %v755 = vmul.f32 %v747, %v747
        %v756 = vmul.f32 %v748, %v748
        %v757 = vmul.f32 %v749, %v749
        %v758 = vmul.f32 %v750, %v750
        %v759 = vadd.f32 %v751, %v753
        %v760 = vadd.f32 %v759, %v755
        %v761 = vadd.f32 %v760, %v757
        %v762 = vrot.slane %v761, 4
        %v763 = vadd.f32 %v761, %v762
        %v764 = vrot.slane %v763, 2
        %v765 = vadd.f32 %v763, %v764
        %v766 = vrot.slane %v765, 1
        %v767 = vadd.f32 %v765, %v766
        %v768 = vadd.f32 %v752, %v754
        %v769 = vadd.f32 %v768, %v756
        %v770 = vadd.f32 %v769, %v758
        %v771 = vrot.slane %v770, 4
        %v772 = vadd.f32 %v770, %v771
        %v773 = vrot.slane %v772, 2
        %v774 = vadd.f32 %v772, %v773
        %v775 = vrot.slane %v774, 1
        %v776 = vadd.f32 %v774, %v775
        %v777 = vmax.f32 %v767, 1e-24
        %v778 = vmax.f32 %v776, 1e-24
        %v779 = vrsqrt.pop %v777
        %v780 = vrsqrt.pop %v778
        %v781 = vld [vmem:[%s4] sm:$0xf]
        %v783 = vsel %vm387, %v781, 0
        %785 = vmatprep.subr.mxu0 %v744
        %786 = vmatpush1.msra.mxu0 %v743
        %787 = vmatprep.subr.mxu0 %v746
        %788 = vmatpush1.msra.mxu0 %v745
        %789 = vmatprep.subr.mxu0 %v748
        %790 = vmatpush1.msra.mxu0 %v747
        %791 = vmatprep.subr.mxu0 %v750
        %792 = vmatpush1.msra.mxu0 %v749
        %793 = vmatprep.subr.mxu0 0.0
        %794 = vmatpush1.msra.mxu0 0.0
        %795 = vmatprep.subr.mxu0 0.0
        %796 = vmatpush1.msra.mxu0 0.0
        %797 = vmatprep.subr.mxu0 0.0
        %798 = vmatpush1.msra.mxu0 0.0
        %799 = vmatprep.subr.mxu0 0.0
        %800 = vmatpush1.msra.mxu0 0.0
        %801 = vmatprep.subr.mxu0 0.0
        %802 = vmatpush1.msra.mxu0 0.0
        %803 = vmatprep.subr.mxu0 0.0
        %804 = vmatpush1.msra.mxu0 0.0
        %805 = vmatprep.subr.mxu0 0.0
        %806 = vmatpush1.msra.mxu0 0.0
        %807 = vmatprep.subr.mxu0 0.0
        %808 = vmatpush1.msra.mxu0 0.0
        %809 = vmatprep.subr.mxu0 0.0
        %810 = vmatpush1.msra.mxu0 0.0
        %811 = vmatprep.subr.mxu0 0.0
        %812 = vmatpush1.msra.mxu0 0.0
        %813 = vmatprep.subr.mxu0 0.0
        %814 = vmatpush1.msra.mxu0 0.0
        %815 = vmatprep.subr.mxu0 0.0
        %816 = vmatpush1.msra.mxu0 0.0
        %817 = vmatprep.subr.mxu0 0.0
        %818 = vmatpush1.msra.mxu0 0.0
        %819 = vmatprep.subr.mxu0 0.0
        %820 = vmatpush1.msra.mxu0 0.0
        %821 = vmatprep.subr.mxu0 0.0
        %822 = vmatpush1.msra.mxu0 0.0
        %823 = vmatprep.subr.mxu0 0.0
        %824 = vmatpush1.msra.mxu0 0.0
        %825 = vmatprep.subr.mxu0 0.0
        %826 = vmatpush1.msra.mxu0 0.0
        %827 = vmatprep.subr.mxu0 0.0
        %828 = vmatpush1.msra.mxu0 0.0
        %829 = vmatprep.subr.mxu0 0.0
        %830 = vmatpush1.msra.mxu0 0.0
        %831 = vmatprep.subr.mxu0 0.0
        %832 = vmatpush1.msra.mxu0 0.0
        %833 = vmatprep.subr.mxu0 0.0
        %834 = vmatpush1.msra.mxu0 0.0
        %835 = vmatprep.subr.mxu0 0.0
        %836 = vmatpush1.msra.mxu0 0.0
        %837 = vmatprep.subr.mxu0 0.0
        %838 = vmatpush1.msra.mxu0 0.0
        %839 = vmatprep.subr.mxu0 0.0
        %840 = vmatpush1.msra.mxu0 0.0
        %841 = vmatprep.subr.mxu0 0.0
        %842 = vmatpush1.msra.mxu0 0.0
        %843 = vmatprep.subr.mxu0 0.0
        %844 = vmatpush1.msra.mxu0 0.0
        %845 = vmatprep.subr.mxu0 0.0
        %846 = vmatpush1.msra.mxu0 0.0
        %847 = vmatprep.subr.mxu0 0.0
        %848 = vmatpush1.msra.mxu0 0.0
        %849 = vmatprep.mubr.f32.mxu0 0.0
        %850 = vmatmul.mubr.f32.gmra.mrb[0].mxu0 %v783
        %v851 = vpop.f32.mrb[0].mxu0
        %v852 = vadd.f32 0.0, %v851
        %v853 = vpop.f32.mrb[0].mxu0
        %v854 = vadd.f32 0.0, %v853
        %855 = vdwg.mxu0
        %v856 = vmul.f32 %v852, %v779
        %v857 = vmul.f32 %v854, %v780
        %vm858 = vcmask 1043456
        %v859 = vsel %vm858, %v856, 0.0
        %v860 = vrot.slane %v859, 4
        %v861 = vadd.f32 %v859, %v860
        %v862 = vrot.slane %v861, 2
        %v863 = vadd.f32 %v861, %v862
        %v864 = vrot.slane %v863, 1
        %v865 = vadd.f32 %v863, %v864
        %v866 = vsel %vm858, %v857, 0.0
        %v867 = vrot.slane %v866, 4
        %v868 = vadd.f32 %v866, %v867
        %v869 = vrot.slane %v868, 2
        %v870 = vadd.f32 %v868, %v869
        %v871 = vrot.slane %v870, 1
        %v872 = vadd.f32 %v870, %v871
        %v873 = vrcp.pop 4.0
        %v874 = vmul.f32 %v865, %v873
        %v875 = vmul.f32 %v872, %v873
        %v876 = vsub.f32 %v856, %v874
        %v877 = vsub.f32 %v857, %v875
        %v878 = vmul.f32 %v876, %v876
        %v879 = vmul.f32 %v877, %v877
        %v880 = vsel %vm858, %v878, 0.0
        %v881 = vrot.slane %v880, 4
        %v882 = vadd.f32 %v880, %v881
        %v883 = vrot.slane %v882, 2
        %v884 = vadd.f32 %v882, %v883
        %v885 = vrot.slane %v884, 1
        %v886 = vadd.f32 %v884, %v885
        %v887 = vsel %vm858, %v879, 0.0
        %v888 = vrot.slane %v887, 4
        %v889 = vadd.f32 %v887, %v888
        %v890 = vrot.slane %v889, 2
        %v891 = vadd.f32 %v889, %v890
        %v892 = vrot.slane %v891, 1
        %v893 = vadd.f32 %v891, %v892
        %v894 = vmul.f32 %v886, %v873
        %v895 = vmul.f32 %v893, %v873
        %v896 = vadd.f32 %v894, 1e-05
        %v897 = vadd.f32 %v895, 1e-05
        %v898 = vrsqrt.pop %v896
        %v899 = vrsqrt.pop %v897
        %v900 = vmul.f32 %v876, %v898
        %v901 = vmul.f32 %v877, %v899
        %903 = vset.pattern.permute.xlu0 0
        %904 = vperm.xlu0 %903, %v366
        %v905 = vpop.permute.xlu0 %904
        %v907 = vmul.f32 %v900, %v905
        %v908 = vmul.f32 %v901, %v905
        %909 = vset.pattern.permute.xlu0 1
        %910 = vperm.xlu0 %909, %v366
        %v911 = vpop.permute.xlu0 %910
        %v913 = vadd.f32 %v907, %v911
        %v914 = vadd.f32 %v908, %v911
        %915 = vst [vmem:[%s335] sm:$0xff] %v644
        %916 = vst [vmem:[%s335 + $0x8] sm:$0xff] %v645
        %917 = vst [vmem:[%s335 + $0x10] sm:$0xff] %v646
        %918 = vst [vmem:[%s335 + $0x18] sm:$0xff] %v647
        %919 = vst [vmem:[%s335 + $0x20] sm:$0xff] %v648
        %920 = vst [vmem:[%s335 + $0x28] sm:$0xff] %v649
        %921 = vst [vmem:[%s335 + $0x30] sm:$0xff] %v650
        %922 = vst [vmem:[%s335 + $0x38] sm:$0xff] %v651
        %v925 = vcombine.low %v913, %v914
        %927 = vst [vmem:[%s342] sm:$0xff] %v925
        %s928 = sand.u32 %s184, 1
        %s929 = scalar_lea.sflag [#allocation4], %s928
        %s930 = sand.u32 %s184, 1
        %s931 = smul.addr %s930, 64
        %s932 = scalar_lea.vmem [#allocation7], %s931
        %s933 = sand.u32 %s212, 1
        %s934 = scalar_lea.sflag [#allocation9], %s933
        %s935 = sand.u32 %s212, 1
        %s936 = smul.addr %s935, 8
        %s937 = scalar_lea.vmem [#allocation8], %s936
        // Predicated region
        $region53: #{tpu_custom_call.1} parent=43 // pred_check
          %p938 = pneg %p194
        $region54: #{tpu_custom_call.1} parent=43 // pred_check_branch
          %940 = sbr.rel (%p938) target = $region56
        $region55: #{tpu_custom_call.1} parent=43 // pred_region
          %s941 = smul.u32 2, %s34
          %s943 = ssub.s32 1024, 1024
          %944 = vsyncadd %s929, %s943
          %s945 = smul.addr %s33, 8
          %s946 = sadd.s32 %s941, %s945
          %s947 = smul.addr %s946, 128
          %s948 = scalar_lea.hbm %s6, %s947
          %s949 = sshll.u32 %s932, 4
          %s950 = int_to_ptr.vmem [resolvable:$true] %s949
          %955 = dma.vmem_to_hbm [thread:$0]  %s950, 1024, %s948, %s929, 256, 256, 16
        $region56: #{tpu_custom_call.1} parent=43 // pred_fallthru
          _
        // Predicated region
        $region57: #{tpu_custom_call.1} parent=43 // pred_check
          %p956 = pneg %p222
        $region58: #{tpu_custom_call.1} parent=43 // pred_check_branch
          %958 = sbr.rel (%p956) target = $region60
        $region59: #{tpu_custom_call.1} parent=43 // pred_region
          %s959 = smul.u32 2, %s34
          %s961 = ssub.s32 128, 128
          %962 = vsyncadd %s934, %s961
          %s963 = smul.addr %s33, 2
          %s964 = sadd.s32 %s959, %s963
          %s965 = smul.addr %s964, 64
          %s966 = scalar_lea.hbm %s7, %s965
          %s968 = sshll.u32 %s937, 4
          %s969 = int_to_ptr.vmem [resolvable:$true] %s968
          %971 = dma.vmem_to_hbm [thread:$0]  %s969, 128, %s966, %s934
        $region60: #{tpu_custom_call.1} parent=43 // pred_fallthru
          _
      $region44: #{tpu_custom_call.1} parent=5 // pred_fallthru
        _
      %p972 = scmp.le.s32.totalorder 2, %s24
      // Predicated region
      $region61: #{tpu_custom_call.1} parent=5 // pred_check
        %p973 = pneg %p972
      $region62: #{tpu_custom_call.1} parent=5 // pred_check_branch
        %975 = sbr.rel (%p973) target = $region64
      $region63: #{tpu_custom_call.1} parent=5 // pred_region
        %s976 = ssub.s32 %s24, 2
        // Predicated region
        $region65: #{tpu_custom_call.1} parent=63 // pred_check
          %p977 = pneg %p200
        $region66: #{tpu_custom_call.1} parent=63 // pred_check_branch
          %979 = sbr.rel (%p977) target = $region68
        $region67: #{tpu_custom_call.1} parent=63 // pred_region
          %s980 = sand.u32 %s185, 1
          %s981 = scalar_lea.sflag [#allocation4], %s980
          %s982 = sand.u32 %s185, 1
          %s983 = smul.addr %s982, 64
          %s984 = scalar_lea.vmem [#allocation7], %s983
          %985 = dma.done %s981, 1024
        $region68: #{tpu_custom_call.1} parent=63 // pred_fallthru
          _
        // Predicated region
        $region69: #{tpu_custom_call.1} parent=63 // pred_check
          %p986 = pneg %p228
        $region70: #{tpu_custom_call.1} parent=63 // pred_check_branch
          %988 = sbr.rel (%p986) target = $region72
        $region71: #{tpu_custom_call.1} parent=63 // pred_region
          %s989 = sand.u32 %s213, 1
          %s990 = scalar_lea.sflag [#allocation9], %s989
          %s991 = sand.u32 %s213, 1
          %s992 = smul.addr %s991, 8
          %s993 = scalar_lea.vmem [#allocation8], %s992
          %994 = dma.done %s990, 128
        $region72: #{tpu_custom_call.1} parent=63 // pred_fallthru
          _
      $region64: #{tpu_custom_call.1} parent=5 // pred_fallthru
        _
    $region6: #{tpu_custom_call.1} parent=1 // loop_footer
      %s28 = sadd.s32 1, %s24
    $region7: #{tpu_custom_call.1} parent=1 // loop_footer_branch
      %23 = sbr.rel target = $region3
    $region8: #{tpu_custom_call.1} parent=1 // loop_exit
      _
    %995 = vsyncpa [#allocation3], 1
    %s996 = scalar_lea.sflag [#allocation3], 1
    %997 = vsyncpa %s996, 1
    %998 = vsyncpa [#allocation6], 1
    %999 = vsyncpa [#allocation4], 1
    %s1000 = scalar_lea.sflag [#allocation4], 1
    %1001 = vsyncpa %s1000, 1
    %1002 = vsyncpa [#allocation9], 1
    %s1003 = scalar_lea.sflag [#allocation9], 1
    %1004 = vsyncpa %s1003, 1

</llo_original>
